<compile_context>
chip_gen: v7x
topology: tpu7x:2x2x1
jax: 0.10.0
libtpu: 0.0.40
codegen_flags: <defaults>
</compile_context>

<pallas_src>
import functools

import jax
import jax.numpy as jnp
from jax.experimental import pallas as pl
from jax.experimental.pallas import tpu as pltpu

_LANE = 128


def _round_up(x, m):
    return ((x + m - 1) // m) * m


def _layernorm_noaffine(x, eps):
    # biased variance + eps inside rsqrt, matching torch.nn.LayerNorm; the
    # affine (gamma/beta) has been folded into the following Linear.
    mean = jnp.mean(x, axis=-1, keepdims=True)
    centered = x - mean
    var = jnp.mean(centered * centered, axis=-1, keepdims=True)
    return centered * jax.lax.rsqrt(var + eps)


def _actor_ii_kernel(x_ref, w1_ref, b1_ref, w2_ref, b2_ref, w3_ref, b3_ref,
                     out_ref, *, eps, discrete_action):
    # FC1 on the (already concatenated) thought input.
    x = jnp.dot(x_ref[...], w1_ref[...],
                preferred_element_type=jnp.float32) + b1_ref[...]
    x = jnp.maximum(x, 0.0)
    x = _layernorm_noaffine(x, eps)                  # LN1 (affine folded into W2/b2)

    x = jnp.dot(x.astype(w2_ref.dtype), w2_ref[...],
                preferred_element_type=jnp.float32) + b2_ref[...]
    x = jnp.maximum(x, 0.0)
    x = _layernorm_noaffine(x, eps)                  # LN2 (affine folded into W3/b3)

    # Final layer computed transposed: result (d_out, tb_rows) so the batch sits
    # on the 128-lane axis -> lane-dense output stores, no in-kernel transpose.
    y = jax.lax.dot_general(
        w3_ref[...], x.astype(w3_ref.dtype),
        dimension_numbers=(((0,), (1,)), ((), ())),
        preferred_element_type=jnp.float32)
    y = y + b3_ref[...]                              # b3 is (d_out, 1)
    if not discrete_action:
        y = jnp.tanh(y)
    out_ref[...] = y.astype(out_ref.dtype)


def actor_ii_forward(thought_before, thought_after, params, *,
                     block_batch=2048, eps=1e-5, discrete_action=False,
                     param_dtype=jnp.bfloat16, out_dtype=jnp.float32):
    """Pallas forward pass for Actor_II.

    thought_before, thought_after: (B, dim_thought) float32
    params: w1 (2*dt,128), b1 (1,128), gamma1/beta1 (128,),
            w2 (128,64),   b2 (1,64),  gamma2/beta2 (64,),
            w3 (64,dim_action), b3 (1,dim_action)
    param_dtype: streaming dtype for MXU inputs/weights (bf16 default);
                 accumulation and LayerNorm math are always f32.
    """
    B, dt = thought_before.shape
    assert thought_after.shape == (B, dt)

    w1, b1 = params["w1"], params["b1"]
    w2, b2 = params["w2"], params["b2"]
    w3, b3 = params["w3"], params["b3"]
    g1, be1 = params["gamma1"], params["beta1"]
    g2, be2 = params["gamma2"], params["beta2"]

    d_in = 2 * dt
    d_h1 = w1.shape[1]          # 128
    d_h2 = w2.shape[1]          # 64
    d_act = w3.shape[1]         # dim_action

    # --- one-time wrapper-side transforms ---------------------------------
    # fold LayerNorm affines into the following Linear
    w2f = g1.reshape(-1, 1) * w2
    b2f = be1.reshape(1, -1) @ w2 + b2.reshape(1, -1)
    w3f = g2.reshape(-1, 1) * w3
    b3f = be2.reshape(1, -1) @ w3 + b3.reshape(1, -1)
    # action-major output: pad action dim only to a sublane multiple of 8
    d_out = _round_up(d_act, 8)
    w3f = jnp.pad(w3f, ((0, 0), (0, d_out - d_act)))
    b3t = jnp.pad(b3f, ((0, 0), (0, d_out - d_act))).reshape(d_out, 1)

    # streaming dtypes: MXU inputs may be bf16; biases stay f32 (added to f32 acc)
    w1c = w1.astype(param_dtype)
    w2c = w2f.astype(param_dtype)
    w3c = w3f.astype(param_dtype)
    b1c = b1.reshape(1, -1).astype(jnp.float32)
    b2c = b2f.astype(jnp.float32)
    b3c = b3t.astype(jnp.float32)

    # single concatenated input (FC1 dots fused); one pad op if needed
    x_in = jnp.concatenate([thought_before, thought_after], axis=-1).astype(param_dtype)

    # --- batch tiling: 128-aligned tiles, >=2 blocks when possible ----------
    b_ceil = _round_up(B, _LANE)
    tb_rows = min(_round_up(block_batch, _LANE), b_ceil)
    if b_ceil >= 2 * _LANE and pl.cdiv(b_ceil, tb_rows) < 2:
        # shrink the tile so the "parallel" batch axis has >=2 grid blocks
        # (v7x second TensorCore + DMA pipelining on all generations)
        tb_rows = max(_LANE, (b_ceil // 2) // _LANE * _LANE)
    n_blocks = pl.cdiv(b_ceil, tb_rows)
    b_pad = n_blocks * tb_rows
    if b_pad != B:
        x_in = jnp.pad(x_in, ((0, b_pad - B), (0, 0)))

    kernel = functools.partial(_actor_ii_kernel, eps=eps,
                               discrete_action=discrete_action)

    itemsize_in = jnp.dtype(param_dtype).itemsize
    itemsize_out = jnp.dtype(out_dtype).itemsize
    weight_bytes = ((w1c.size + w2c.size + w3c.size) * itemsize_in
                    + (b1c.size + b2c.size + b3c.size) * 4)
    cost = pl.CostEstimate(
        flops=2 * b_pad * (d_in * d_h1 + d_h1 * d_h2 + d_h2 * d_out),
        transcendentals=b_pad * (2 + d_out),
        bytes_accessed=(b_pad * d_in * itemsize_in
                        + b_pad * d_out * itemsize_out
                        + weight_bytes),
    )

    out_t = pl.pallas_call(
        kernel,
        out_shape=jax.ShapeDtypeStruct((d_out, b_pad), out_dtype),
        grid_spec=pltpu.PrefetchScalarGridSpec(
            num_scalar_prefetch=0,
            grid=(n_blocks,),
            in_specs=[
                pl.BlockSpec((tb_rows, d_in), lambda i: (i, 0)),   # thought tile
                pl.BlockSpec((d_in, d_h1), lambda i: (0, 0)),      # W1 (resident)
                pl.BlockSpec((1, d_h1), lambda i: (0, 0)),         # b1
                pl.BlockSpec((d_h1, d_h2), lambda i: (0, 0)),      # W2 (LN1 folded)
                pl.BlockSpec((1, d_h2), lambda i: (0, 0)),         # b2 (LN1 folded)
                pl.BlockSpec((d_h2, d_out), lambda i: (0, 0)),     # W3 (LN2 folded)
                pl.BlockSpec((d_out, 1), lambda i: (0, 0)),        # b3 (LN2 folded, col)
            ],
            out_specs=pl.BlockSpec((d_out, tb_rows), lambda i: (0, i)),
        ),
        compiler_params=pltpu.CompilerParams(
            dimension_semantics=("parallel",)),
        cost_estimate=cost,
    )(x_in, w1c, b1c, w2c, b2c, w3c, b3c)

    # back to (B, d_act); tiny transpose since d_act is small
    return out_t[:d_act, :B].T


def init_actor_ii_params(key, dim_thought, dim_action):
    """Deterministic synthetic init (PyTorch-Linear-style uniform bounds)."""
    ks = jax.random.split(key, 10)
    d_in = dim_thought * 2
    bound1 = 1.0 / jnp.sqrt(d_in)
    bound2 = 1.0 / jnp.sqrt(128.0)
    bound3 = 1.0 / jnp.sqrt(64.0)
    w1 = jax.random.uniform(ks[0], (d_in, 128), jnp.float32, -bound1, bound1)
    b1 = jax.random.uniform(ks[1], (1, 128), jnp.float32, -bound1, bound1)
    w2 = jax.random.uniform(ks[2], (128, 64), jnp.float32, -bound2, bound2)
    b2 = jax.random.uniform(ks[3], (1, 64), jnp.float32, -bound2, bound2)
    w3 = jax.random.uniform(ks[4], (64, dim_action), jnp.float32, -bound3, bound3)
    b3 = jax.random.uniform(ks[5], (1, dim_action), jnp.float32, -bound3, bound3)
    # non-trivial LayerNorm affine so the wrapper-side fold is actually exercised
    gamma1 = jax.random.uniform(ks[6], (128,), jnp.float32, 0.5, 1.5)
    beta1 = jax.random.uniform(ks[7], (128,), jnp.float32, -0.5, 0.5)
    gamma2 = jax.random.uniform(ks[8], (64,), jnp.float32, 0.5, 1.5)
    beta2 = jax.random.uniform(ks[9], (64,), jnp.float32, -0.5, 0.5)
    return dict(w1=w1, b1=b1, gamma1=gamma1, beta1=beta1,
                w2=w2, b2=b2, gamma2=gamma2, beta2=beta2,
                w3=w3, b3=b3)


def actor_ii_reference(thought_before, thought_after, params, *,
                       eps=1e-5, discrete_action=False):
    """Pure-JAX reference matching the PyTorch module exactly."""
    x = jnp.concatenate([thought_before, thought_after], axis=-1)
    x = x @ params["w1"] + params["b1"]
    x = jnp.maximum(x, 0.0)
    mean = jnp.mean(x, -1, keepdims=True)
    var = jnp.mean((x - mean) ** 2, -1, keepdims=True)
    x = (x - mean) / jnp.sqrt(var + eps)
    x = x * params["gamma1"] + params["beta1"]
    x = x @ params["w2"] + params["b2"]
    x = jnp.maximum(x, 0.0)
    mean = jnp.mean(x, -1, keepdims=True)
    var = jnp.mean((x - mean) ** 2, -1, keepdims=True)
    x = (x - mean) / jnp.sqrt(var + eps)
    x = x * params["gamma2"] + params["beta2"]
    x = x @ params["w3"] + params["b3"]
    return x if discrete_action else jnp.tanh(x)


if __name__ == "__main__":
    dim_thought = 32
    dim_action = 5

    key = jax.random.PRNGKey(0)
    kp, ka, kb, kc, kd = jax.random.split(key, 5)
    params = init_actor_ii_params(kp, dim_thought, dim_action)

    # -- small batch (not a multiple of 8): single-block path ---------------
    batch = 10
    t_before = jax.random.normal(ka, (batch, dim_thought), jnp.float32)
    t_after = jax.random.normal(kb, (batch, dim_thought), jnp.float32)
    ref = actor_ii_reference(t_before, t_after, params)

    # exact f32 streaming path (strict check)
    out_f32 = actor_ii_forward(t_before, t_after, params,
                               param_dtype=jnp.float32)
    out_f32 = jax.block_until_ready(out_f32)
    assert out_f32.shape == (batch, dim_action)
    assert jnp.allclose(out_f32, ref, atol=1e-4, rtol=1e-4), "f32 mismatch vs reference"

    # default bf16 streaming path (f32 accumulation; loose tolerance)
    out_bf16 = actor_ii_forward(t_before, t_after, params)
    out_bf16 = jax.block_until_ready(out_bf16)
    assert out_bf16.shape == (batch, dim_action)
    assert jnp.allclose(out_bf16, ref, atol=1e-1), "bf16 mismatch vs reference"

    # -- larger batch: exercises the multi-block transposed-output path -----
    batch2 = 300
    t_before2 = jax.random.normal(kc, (batch2, dim_thought), jnp.float32)
    t_after2 = jax.random.normal(kd, (batch2, dim_thought), jnp.float32)
    ref2 = actor_ii_reference(t_before2, t_after2, params)
    out2 = actor_ii_forward(t_before2, t_after2, params,
                            param_dtype=jnp.float32)
    out2 = jax.block_until_ready(out2)
    assert out2.shape == (batch2, dim_action)
    assert jnp.allclose(out2, ref2, atol=1e-4, rtol=1e-4), "multi-block mismatch vs reference"

    print("KERNEL_OK")
</pallas_src>

<mosaic_0001>
module attributes {stable_mosaic.version = 11 : i64} {
  func.func @_actor_ii_kernel(%arg0: i32, %arg1: memref<128x64xf32, #tpu.memory_space<vmem>>, %arg2: memref<64x128xf32, #tpu.memory_space<vmem>>, %arg3: memref<1x128xf32, #tpu.memory_space<vmem>>, %arg4: memref<128x64xf32, #tpu.memory_space<vmem>>, %arg5: memref<1x64xf32, #tpu.memory_space<vmem>>, %arg6: memref<64x8xf32, #tpu.memory_space<vmem>>, %arg7: memref<8x1xf32, #tpu.memory_space<vmem>>, %arg8: memref<8x128xf32, #tpu.memory_space<vmem>>) attributes {dimension_semantics = [#tpu.dimension_semantics<parallel>], iteration_bounds = array<i64: 1>, scalar_prefetch = 0 : i64, scratch_operands = 0 : i64, tpu.core_type = #tpu.core_type<tc>, window_params = [{transform_indices = @transform_0, window_bounds = array<i64: 128, 64>}, {pipeline_mode = #tpu.pipeline_mode<synchronous>, transform_indices = @transform_1, window_bounds = array<i64: 64, 128>}, {pipeline_mode = #tpu.pipeline_mode<synchronous>, transform_indices = @transform_2, window_bounds = array<i64: 1, 128>}, {pipeline_mode = #tpu.pipeline_mode<synchronous>, transform_indices = @transform_3, window_bounds = array<i64: 128, 64>}, {pipeline_mode = #tpu.pipeline_mode<synchronous>, transform_indices = @transform_4, window_bounds = array<i64: 1, 64>}, {pipeline_mode = #tpu.pipeline_mode<synchronous>, transform_indices = @transform_5, window_bounds = array<i64: 64, 8>}, {pipeline_mode = #tpu.pipeline_mode<synchronous>, transform_indices = @transform_6, window_bounds = array<i64: 8, 1>}, {transform_indices = @transform_7, window_bounds = array<i64: 8, 128>}]} {
    %c0 = arith.constant 0 : index
    %c0_0 = arith.constant 0 : index
    %0 = vector.load %arg1[%c0, %c0_0] : memref<128x64xf32, #tpu.memory_space<vmem>>, vector<128x64xf32>
    %c0_1 = arith.constant 0 : index
    %c0_2 = arith.constant 0 : index
    %1 = vector.load %arg2[%c0_1, %c0_2] : memref<64x128xf32, #tpu.memory_space<vmem>>, vector<64x128xf32>
    %cst = arith.constant dense<0.000000e+00> : vector<128x128xf32>
    %2 = tpu.matmul %0, %1, %cst {dimension_numbers = #tpu.dot_dimension_numbers<[1], [0], [0], [1], [0, 0, 1, 1], [], []>} : vector<128x64xf32>, vector<64x128xf32>, vector<128x128xf32> -> vector<128x128xf32>
    %c0_3 = arith.constant 0 : index
    %c0_4 = arith.constant 0 : index
    %3 = vector.load %arg3[%c0_3, %c0_4] : memref<1x128xf32, #tpu.memory_space<vmem>>, vector<1x128xf32>
    %4 = vector.broadcast %3 : vector<1x128xf32> to vector<128x128xf32>
    %5 = arith.addf %2, %4 : vector<128x128xf32>
    %cst_5 = arith.constant 0.000000e+00 : f32
    %6 = vector.broadcast %cst_5 : f32 to vector<128x128xf32>
    %7 = arith.maximumf %5, %6 : vector<128x128xf32>
    %cst_6 = arith.constant dense<0.000000e+00> : vector<128xf32>
    %8 = vector.multi_reduction <add>, %7, %cst_6 [1] : vector<128x128xf32> to vector<128xf32>
    %9 = vector.shape_cast %8 : vector<128xf32> to vector<128x1xf32>
    %cst_7 = arith.constant 1.280000e+02 : f32
    %10 = vector.broadcast %cst_7 : f32 to vector<128x1xf32>
    %11 = arith.divf %9, %10 : vector<128x1xf32>
    %12 = vector.broadcast %11 : vector<128x1xf32> to vector<128x128xf32>
    %13 = arith.subf %7, %12 : vector<128x128xf32>
    %14 = arith.mulf %13, %13 : vector<128x128xf32>
    %cst_8 = arith.constant dense<0.000000e+00> : vector<128xf32>
    %15 = vector.multi_reduction <add>, %14, %cst_8 [1] : vector<128x128xf32> to vector<128xf32>
    %16 = vector.shape_cast %15 : vector<128xf32> to vector<128x1xf32>
    %cst_9 = arith.constant 1.280000e+02 : f32
    %17 = vector.broadcast %cst_9 : f32 to vector<128x1xf32>
    %18 = arith.divf %16, %17 : vector<128x1xf32>
    %cst_10 = arith.constant 9.99999974E-6 : f32
    %19 = vector.broadcast %cst_10 : f32 to vector<128x1xf32>
    %20 = arith.addf %18, %19 : vector<128x1xf32>
    %21 = math.rsqrt %20 : vector<128x1xf32>
    %22 = vector.broadcast %21 : vector<128x1xf32> to vector<128x128xf32>
    %23 = arith.mulf %13, %22 : vector<128x128xf32>
    %c0_11 = arith.constant 0 : index
    %c0_12 = arith.constant 0 : index
    %24 = vector.load %arg4[%c0_11, %c0_12] : memref<128x64xf32, #tpu.memory_space<vmem>>, vector<128x64xf32>
    %cst_13 = arith.constant dense<0.000000e+00> : vector<128x64xf32>
    %25 = tpu.matmul %23, %24, %cst_13 {dimension_numbers = #tpu.dot_dimension_numbers<[1], [0], [0], [1], [0, 0, 1, 1], [], []>} : vector<128x128xf32>, vector<128x64xf32>, vector<128x64xf32> -> vector<128x64xf32>
    %c0_14 = arith.constant 0 : index
    %c0_15 = arith.constant 0 : index
    %26 = vector.load %arg5[%c0_14, %c0_15] : memref<1x64xf32, #tpu.memory_space<vmem>>, vector<1x64xf32>
    %27 = vector.broadcast %26 : vector<1x64xf32> to vector<128x64xf32>
    %28 = arith.addf %25, %27 : vector<128x64xf32>
    %cst_16 = arith.constant 0.000000e+00 : f32
    %29 = vector.broadcast %cst_16 : f32 to vector<128x64xf32>
    %30 = arith.maximumf %28, %29 : vector<128x64xf32>
    %cst_17 = arith.constant dense<0.000000e+00> : vector<128xf32>
    %31 = vector.multi_reduction <add>, %30, %cst_17 [1] : vector<128x64xf32> to vector<128xf32>
    %32 = vector.shape_cast %31 : vector<128xf32> to vector<128x1xf32>
    %cst_18 = arith.constant 6.400000e+01 : f32
    %33 = vector.broadcast %cst_18 : f32 to vector<128x1xf32>
    %34 = arith.divf %32, %33 : vector<128x1xf32>
    %35 = vector.broadcast %34 : vector<128x1xf32> to vector<128x64xf32>
    %36 = arith.subf %30, %35 : vector<128x64xf32>
    %37 = arith.mulf %36, %36 : vector<128x64xf32>
    %cst_19 = arith.constant dense<0.000000e+00> : vector<128xf32>
    %38 = vector.multi_reduction <add>, %37, %cst_19 [1] : vector<128x64xf32> to vector<128xf32>
    %39 = vector.shape_cast %38 : vector<128xf32> to vector<128x1xf32>
    %cst_20 = arith.constant 6.400000e+01 : f32
    %40 = vector.broadcast %cst_20 : f32 to vector<128x1xf32>
    %41 = arith.divf %39, %40 : vector<128x1xf32>
    %cst_21 = arith.constant 9.99999974E-6 : f32
    %42 = vector.broadcast %cst_21 : f32 to vector<128x1xf32>
    %43 = arith.addf %41, %42 : vector<128x1xf32>
    %44 = math.rsqrt %43 : vector<128x1xf32>
    %45 = vector.broadcast %44 : vector<128x1xf32> to vector<128x64xf32>
    %46 = arith.mulf %36, %45 : vector<128x64xf32>
    %c0_22 = arith.constant 0 : index
    %c0_23 = arith.constant 0 : index
    %47 = vector.load %arg6[%c0_22, %c0_23] : memref<64x8xf32, #tpu.memory_space<vmem>>, vector<64x8xf32>
    %cst_24 = arith.constant dense<0.000000e+00> : vector<8x128xf32>
    %48 = tpu.matmul %47, %46, %cst_24 {dimension_numbers = #tpu.dot_dimension_numbers<[0], [1], [1], [0], [0, 1, 1, 0], [], []>} : vector<64x8xf32>, vector<128x64xf32>, vector<8x128xf32> -> vector<8x128xf32>
    %c0_25 = arith.constant 0 : index
    %c0_26 = arith.constant 0 : index
    %49 = vector.load %arg7[%c0_25, %c0_26] : memref<8x1xf32, #tpu.memory_space<vmem>>, vector<8x1xf32>
    %50 = vector.broadcast %49 : vector<8x1xf32> to vector<8x128xf32>
    %51 = arith.addf %48, %50 : vector<8x128xf32>
    %52 = math.tanh %51 : vector<8x128xf32>
    %c0_27 = arith.constant 0 : index
    %c0_28 = arith.constant 0 : index
    %53 = vector.load %arg8[%c0_27, %c0_28] : memref<8x128xf32, #tpu.memory_space<vmem>>, vector<8x128xf32>
    tpu.vector_store %arg8[%c0_27, %c0_28], %52 {strides = array<i32>} : memref<8x128xf32, #tpu.memory_space<vmem>>, vector<8x128xf32>,
    return
  }
  func.func @transform_0(%arg0: i32) -> (i32, i32) {
    %c0_i32 = arith.constant 0 : i32
    %c0_i32_0 = arith.constant 0 : i32
    return %arg0, %c0_i32 : i32, i32
  }
  func.func @transform_1(%arg0: i32) -> (i32, i32) {
    %c0_i32 = arith.constant 0 : i32
    %c0_i32_0 = arith.constant 0 : i32
    %c0_i32_1 = arith.constant 0 : i32
    return %c0_i32, %c0_i32_0 : i32, i32
  }
  func.func @transform_2(%arg0: i32) -> (i32, i32) {
    %c0_i32 = arith.constant 0 : i32
    %c0_i32_0 = arith.constant 0 : i32
    %c0_i32_1 = arith.constant 0 : i32
    return %c0_i32, %c0_i32_0 : i32, i32
  }
  func.func @transform_3(%arg0: i32) -> (i32, i32) {
    %c0_i32 = arith.constant 0 : i32
    %c0_i32_0 = arith.constant 0 : i32
    %c0_i32_1 = arith.constant 0 : i32
    return %c0_i32, %c0_i32_0 : i32, i32
  }
  func.func @transform_4(%arg0: i32) -> (i32, i32) {
    %c0_i32 = arith.constant 0 : i32
    %c0_i32_0 = arith.constant 0 : i32
    %c0_i32_1 = arith.constant 0 : i32
    return %c0_i32, %c0_i32_0 : i32, i32
  }
  func.func @transform_5(%arg0: i32) -> (i32, i32) {
    %c0_i32 = arith.constant 0 : i32
    %c0_i32_0 = arith.constant 0 : i32
    %c0_i32_1 = arith.constant 0 : i32
    return %c0_i32, %c0_i32_0 : i32, i32
  }
  func.func @transform_6(%arg0: i32) -> (i32, i32) {
    %c0_i32 = arith.constant 0 : i32
    %c0_i32_0 = arith.constant 0 : i32
    %c0_i32_1 = arith.constant 0 : i32
    return %c0_i32, %c0_i32_0 : i32, i32
  }
  func.func @transform_7(%arg0: i32) -> (i32, i32) {
    %c0_i32 = arith.constant 0 : i32
    %c0_i32_0 = arith.constant 0 : i32
    return %c0_i32, %arg0 : i32, i32
  }
}

</mosaic_0001>

<llo_original>
// kernel: tpu_custom_call.1
$region0: #{tpu_custom_call.1}
  #allocation0 [shape = 'u32[]', space=smem, size = 0x4, offset = 0x4, fixed_abs, tag = 'smem constant byte address 0x4 - core index']
  #allocation1 [shape = 'u32[144,128]{1,0:T(1,128)}', space=vmem, size = 0x12000, scoped, tag = 'internal scratch']
  %s0 = inlined_call_operand.vmem [shape: f32[128,64], index: 0, kind: input, shape index: {}]
  %s1 = inlined_call_operand.vmem [shape: f32[64,128], index: 1, kind: input, shape index: {}]
  %s2 = inlined_call_operand.vmem [shape: f32[1,128], index: 2, kind: input, shape index: {}]
  %s3 = inlined_call_operand.vmem [shape: f32[128,64], index: 3, kind: input, shape index: {}]
  %s4 = inlined_call_operand.vmem [shape: f32[1,64], index: 4, kind: input, shape index: {}]
  %s5 = inlined_call_operand.vmem [shape: f32[64,8], index: 5, kind: input, shape index: {}]
  %s6 = inlined_call_operand.vmem [shape: f32[8,1], index: 6, kind: input, shape index: {}]
  %s7 = inlined_call_operand.hbm [shape: f32[8,128], index: 7, kind: output, shape index: {}]
  %s8 = sld [smem:[#allocation0]]
  $region38: #{tpu_custom_call.1} parent=0
    _
  %s10 = ssub.s32 1, %s8
  %s11 = scalar_select 0, %s10, %s8
  $region1: #{tpu_custom_call.1} parent=0
    #allocation2 [shape = 'u8[4096]{0}', space=vmem, size = 0x1000, scoped, tag = 'output window, operand 0, single buffered']
    #allocation3 [shape = 's32[1]{0}', space=sflag, size = 0x4, scoped, tag = 'scoped memory for tpu_custom_call.1']
    %12 = vsyncpa [#allocation3], 0
    // Predicated region
    $region2: #{tpu_custom_call.1} parent=1 // pred_check
      _
    $region3: #{tpu_custom_call.1} parent=1 // pred_check_branch
      %14 = sbr.rel (0) target = $region5
    $region4: #{tpu_custom_call.1} parent=1 // pred_region
      _
    $region5: #{tpu_custom_call.1} parent=1 // pred_fallthru
      _
    // Predicated region
    $region6: #{tpu_custom_call.1} parent=1 // pred_check
      _
    $region7: #{tpu_custom_call.1} parent=1 // pred_check_branch
      %16 = sbr.rel (0) target = $region9
    $region8: #{tpu_custom_call.1} parent=1 // pred_region
      _
    $region9: #{tpu_custom_call.1} parent=1 // pred_fallthru
      _
    // Predicated region
    $region10: #{tpu_custom_call.1} parent=1 // pred_check
      _
    $region11: #{tpu_custom_call.1} parent=1 // pred_check_branch
      %18 = sbr.rel (0) target = $region13
    $region12: #{tpu_custom_call.1} parent=1 // pred_region
      _
    $region13: #{tpu_custom_call.1} parent=1 // pred_fallthru
      _
    // Predicated region
    $region14: #{tpu_custom_call.1} parent=1 // pred_check
      _
    $region15: #{tpu_custom_call.1} parent=1 // pred_check_branch
      %20 = sbr.rel (0) target = $region17
    $region16: #{tpu_custom_call.1} parent=1 // pred_region
      _
    $region17: #{tpu_custom_call.1} parent=1 // pred_fallthru
      _
    // Predicated region
    $region18: #{tpu_custom_call.1} parent=1 // pred_check
      _
    $region19: #{tpu_custom_call.1} parent=1 // pred_check_branch
      %22 = sbr.rel (0) target = $region21
    $region20: #{tpu_custom_call.1} parent=1 // pred_region
      _
    $region21: #{tpu_custom_call.1} parent=1 // pred_fallthru
      _
    // Predicated region
    $region22: #{tpu_custom_call.1} parent=1 // pred_check
      _
    $region23: #{tpu_custom_call.1} parent=1 // pred_check_branch
      %24 = sbr.rel (0) target = $region25
    $region24: #{tpu_custom_call.1} parent=1 // pred_region
      _
    $region25: #{tpu_custom_call.1} parent=1 // pred_fallthru
      _
    // Predicated region
    $region26: #{tpu_custom_call.1} parent=1 // pred_check
      _
    $region27: #{tpu_custom_call.1} parent=1 // pred_check_branch
      %26 = sbr.rel (0) target = $region29
    $region28: #{tpu_custom_call.1} parent=1 // pred_region
      _
    $region29: #{tpu_custom_call.1} parent=1 // pred_fallthru
      _
    %v27 = vld [vmem:[%s0] sm:$0xff]
    %v28 = vld [vmem:[%s0 + $0x8] sm:$0xff]
    %v29 = vld [vmem:[%s0 + $0x10] sm:$0xff]
    %v30 = vld [vmem:[%s0 + $0x18] sm:$0xff]
    %v31 = vld [vmem:[%s0 + $0x20] sm:$0xff]
    %v32 = vld [vmem:[%s0 + $0x28] sm:$0xff]
    %v33 = vld [vmem:[%s0 + $0x30] sm:$0xff]
    %v34 = vld [vmem:[%s0 + $0x38] sm:$0xff]
    %v35 = vld [vmem:[%s0 + $0x40] sm:$0xff]
    %v36 = vld [vmem:[%s0 + $0x48] sm:$0xff]
    %v37 = vld [vmem:[%s0 + $0x50] sm:$0xff]
    %v38 = vld [vmem:[%s0 + $0x58] sm:$0xff]
    %v39 = vld [vmem:[%s0 + $0x60] sm:$0xff]
    %v40 = vld [vmem:[%s0 + $0x68] sm:$0xff]
    %v41 = vld [vmem:[%s0 + $0x70] sm:$0xff]
    %v42 = vld [vmem:[%s0 + $0x78] sm:$0xff]
    %v43 = vld [vmem:[%s1] sm:$0xff]
    %v44 = vld [vmem:[%s1 + $0x8] sm:$0xff]
    %v45 = vld [vmem:[%s1 + $0x10] sm:$0xff]
    %v46 = vld [vmem:[%s1 + $0x18] sm:$0xff]
    %v47 = vld [vmem:[%s1 + $0x20] sm:$0xff]
    %v48 = vld [vmem:[%s1 + $0x28] sm:$0xff]
    %v49 = vld [vmem:[%s1 + $0x30] sm:$0xff]
    %v50 = vld [vmem:[%s1 + $0x38] sm:$0xff]
    %v51 = vld [vmem:[%s2] sm:$0x1]
    %v53 = vlaneseq
    %v54 = vshrl.u32 %v53, 7
    %v55 = vsub.s32 0, %v54
    %v56 = vrot.slane %v51, %v55
    %vm58 = vcmask 523264
    %v60 = vsel %vm58, %v27, 0
    %v63 = vsel %vm58, %v28, 0
    %v66 = vsel %vm58, %v29, 0
    %v69 = vsel %vm58, %v30, 0
    %v72 = vsel %vm58, %v31, 0
    %v75 = vsel %vm58, %v32, 0
    %v78 = vsel %vm58, %v33, 0
    %v81 = vsel %vm58, %v34, 0
    %v84 = vsel %vm58, %v35, 0
    %v87 = vsel %vm58, %v36, 0
    %v90 = vsel %vm58, %v37, 0
    %v93 = vsel %vm58, %v38, 0
    %v96 = vsel %vm58, %v39, 0
    %v99 = vsel %vm58, %v40, 0
    %v102 = vsel %vm58, %v41, 0
    %v105 = vsel %vm58, %v42, 0
    %107 = vmatprep.subr.mxu0 0.0
    %108 = vmatpush1.msra.mxu0 %v43
    %109 = vmatprep.subr.mxu0 0.0
    %110 = vmatpush1.msra.mxu0 %v44
    %111 = vmatprep.subr.mxu0 0.0
    %112 = vmatpush1.msra.mxu0 %v45
    %113 = vmatprep.subr.mxu0 0.0
    %114 = vmatpush1.msra.mxu0 %v46
    %115 = vmatprep.subr.mxu0 0.0
    %116 = vmatpush1.msra.mxu0 %v47
    %117 = vmatprep.subr.mxu0 0.0
    %118 = vmatpush1.msra.mxu0 %v48
    %119 = vmatprep.subr.mxu0 0.0
    %120 = vmatpush1.msra.mxu0 %v49
    %121 = vmatprep.subr.mxu0 0.0
    %122 = vmatpush1.msra.mxu0 %v50
    %123 = vmatprep.subr.mxu0 0.0
    %124 = vmatpush1.msra.mxu0 0.0
    %125 = vmatprep.subr.mxu0 0.0
    %126 = vmatpush1.msra.mxu0 0.0
    %127 = vmatprep.subr.mxu0 0.0
    %128 = vmatpush1.msra.mxu0 0.0
    %129 = vmatprep.subr.mxu0 0.0
    %130 = vmatpush1.msra.mxu0 0.0
    %131 = vmatprep.subr.mxu0 0.0
    %132 = vmatpush1.msra.mxu0 0.0
    %133 = vmatprep.subr.mxu0 0.0
    %134 = vmatpush1.msra.mxu0 0.0
    %135 = vmatprep.subr.mxu0 0.0
    %136 = vmatpush1.msra.mxu0 0.0
    %137 = vmatprep.subr.mxu0 0.0
    %138 = vmatpush1.msra.mxu0 0.0
    %139 = vmatprep.subr.mxu0 0.0
    %140 = vmatpush1.msra.mxu0 0.0
    %141 = vmatprep.subr.mxu0 0.0
    %142 = vmatpush1.msra.mxu0 0.0
    %143 = vmatprep.subr.mxu0 0.0
    %144 = vmatpush1.msra.mxu0 0.0
    %145 = vmatprep.subr.mxu0 0.0
    %146 = vmatpush1.msra.mxu0 0.0
    %147 = vmatprep.subr.mxu0 0.0
    %148 = vmatpush1.msra.mxu0 0.0
    %149 = vmatprep.subr.mxu0 0.0
    %150 = vmatpush1.msra.mxu0 0.0
    %151 = vmatprep.subr.mxu0 0.0
    %152 = vmatpush1.msra.mxu0 0.0
    %153 = vmatprep.subr.mxu0 0.0
    %154 = vmatpush1.msra.mxu0 0.0
    %155 = vmatprep.subr.mxu0 0.0
    %156 = vmatpush1.msra.mxu0 0.0
    %157 = vmatprep.subr.mxu0 0.0
    %158 = vmatpush1.msra.mxu0 0.0
    %159 = vmatprep.subr.mxu0 0.0
    %160 = vmatpush1.msra.mxu0 0.0
    %161 = vmatprep.subr.mxu0 0.0
    %162 = vmatpush1.msra.mxu0 0.0
    %163 = vmatprep.subr.mxu0 0.0
    %164 = vmatpush1.msra.mxu0 0.0
    %165 = vmatprep.subr.mxu0 0.0
    %166 = vmatpush1.msra.mxu0 0.0
    %167 = vmatprep.subr.mxu0 0.0
    %168 = vmatpush1.msra.mxu0 0.0
    %169 = vmatprep.subr.mxu0 0.0
    %170 = vmatpush1.msra.mxu0 0.0
    %171 = vmatprep.mubr.f32.mxu0 0.0
    %172 = vmatmul.mubr.f32.gmra.mrb[0].mxu0 %v60
    %v173 = vpop.f32.mrb[0].mxu0
    %v174 = vadd.f32 %v56, %v173
    %v175 = vpop.f32.mrb[0].mxu0
    %176 = vmatprep.mubr.f32.mxu0 0.0
    %177 = vmatmul.mubr.f32.gmra.mrb[0].mxu0 %v63
    %v178 = vpop.f32.mrb[0].mxu0
    %v179 = vadd.f32 %v56, %v178
    %v180 = vpop.f32.mrb[0].mxu0
    %181 = vmatprep.mubr.f32.mxu0 0.0
    %182 = vmatmul.mubr.f32.gmra.mrb[0].mxu0 %v66
    %v183 = vpop.f32.mrb[0].mxu0
    %v184 = vadd.f32 %v56, %v183
    %v185 = vpop.f32.mrb[0].mxu0
    %186 = vmatprep.mubr.f32.mxu0 0.0
    %187 = vmatmul.mubr.f32.gmra.mrb[0].mxu0 %v69
    %v188 = vpop.f32.mrb[0].mxu0
    %v189 = vadd.f32 %v56, %v188
    %v190 = vpop.f32.mrb[0].mxu0
    %191 = vmatprep.mubr.f32.mxu0 0.0
    %192 = vmatmul.mubr.f32.gmra.mrb[0].mxu0 %v72
    %v193 = vpop.f32.mrb[0].mxu0
    %v194 = vadd.f32 %v56, %v193
    %v195 = vpop.f32.mrb[0].mxu0
    %196 = vmatprep.mubr.f32.mxu0 0.0
    %197 = vmatmul.mubr.f32.gmra.mrb[0].mxu0 %v75
    %v198 = vpop.f32.mrb[0].mxu0
    %v199 = vadd.f32 %v56, %v198
    %v200 = vpop.f32.mrb[0].mxu0
    %201 = vmatprep.mubr.f32.mxu0 0.0
    %202 = vmatmul.mubr.f32.gmra.mrb[0].mxu0 %v78
    %v203 = vpop.f32.mrb[0].mxu0
    %v204 = vadd.f32 %v56, %v203
    %v205 = vpop.f32.mrb[0].mxu0
    %206 = vmatprep.mubr.f32.mxu0 0.0
    %207 = vmatmul.mubr.f32.gmra.mrb[0].mxu0 %v81
    %v208 = vpop.f32.mrb[0].mxu0
    %v209 = vadd.f32 %v56, %v208
    %v210 = vpop.f32.mrb[0].mxu0
    %211 = vmatprep.mubr.f32.mxu0 0.0
    %212 = vmatmul.mubr.f32.gmra.mrb[0].mxu0 %v84
    %v213 = vpop.f32.mrb[0].mxu0
    %v214 = vadd.f32 %v56, %v213
    %v215 = vpop.f32.mrb[0].mxu0
    %216 = vmatprep.mubr.f32.mxu0 0.0
    %217 = vmatmul.mubr.f32.gmra.mrb[0].mxu0 %v87
    %v218 = vpop.f32.mrb[0].mxu0
    %v219 = vadd.f32 %v56, %v218
    %v220 = vpop.f32.mrb[0].mxu0
    %221 = vmatprep.mubr.f32.mxu0 0.0
    %222 = vmatmul.mubr.f32.gmra.mrb[0].mxu0 %v90
    %v223 = vpop.f32.mrb[0].mxu0
    %v224 = vadd.f32 %v56, %v223
    %v225 = vpop.f32.mrb[0].mxu0
    %226 = vmatprep.mubr.f32.mxu0 0.0
    %227 = vmatmul.mubr.f32.gmra.mrb[0].mxu0 %v93
    %v228 = vpop.f32.mrb[0].mxu0
    %v229 = vadd.f32 %v56, %v228
    %v230 = vpop.f32.mrb[0].mxu0
    %231 = vmatprep.mubr.f32.mxu0 0.0
    %232 = vmatmul.mubr.f32.gmra.mrb[0].mxu0 %v96
    %v233 = vpop.f32.mrb[0].mxu0
    %v234 = vadd.f32 %v56, %v233
    %v235 = vpop.f32.mrb[0].mxu0
    %236 = vmatprep.mubr.f32.mxu0 0.0
    %237 = vmatmul.mubr.f32.gmra.mrb[0].mxu0 %v99
    %v238 = vpop.f32.mrb[0].mxu0
    %v239 = vadd.f32 %v56, %v238
    %v240 = vpop.f32.mrb[0].mxu0
    %241 = vmatprep.mubr.f32.mxu0 0.0
    %242 = vmatmul.mubr.f32.gmra.mrb[0].mxu0 %v102
    %v243 = vpop.f32.mrb[0].mxu0
    %v244 = vadd.f32 %v56, %v243
    %v245 = vpop.f32.mrb[0].mxu0
    %246 = vmatprep.mubr.f32.mxu0 0.0
    %247 = vmatmul.mubr.f32.gmra.mrb[0].mxu0 %v105
    %v248 = vpop.f32.mrb[0].mxu0
    %v249 = vadd.f32 %v56, %v248
    %v250 = vpop.f32.mrb[0].mxu0
    %251 = vdwg.mxu0
    %v252 = vmax.f32 %v174, 0.0
    %v253 = vmax.f32 %v179, 0.0
    %v254 = vmax.f32 %v184, 0.0
    %v255 = vmax.f32 %v189, 0.0
    %v256 = vmax.f32 %v194, 0.0
    %v257 = vmax.f32 %v199, 0.0
    %v258 = vmax.f32 %v204, 0.0
    %v259 = vmax.f32 %v209, 0.0
    %v260 = vmax.f32 %v214, 0.0
    %v261 = vmax.f32 %v219, 0.0
    %v262 = vmax.f32 %v224, 0.0
    %v263 = vmax.f32 %v229, 0.0
    %v264 = vmax.f32 %v234, 0.0
    %v265 = vmax.f32 %v239, 0.0
    %v266 = vmax.f32 %v244, 0.0
    %v267 = vmax.f32 %v249, 0.0
    %268 = vadd.xlane.f32.xlu0 %v252
    %v269 = vpop.xlane.xlu0 %268
    %270 = vadd.xlane.f32.xlu0 %v253
    %v271 = vpop.xlane.xlu0 %270
    %272 = vadd.xlane.f32.xlu0 %v254
    %v273 = vpop.xlane.xlu0 %272
    %274 = vadd.xlane.f32.xlu0 %v255
    %v275 = vpop.xlane.xlu0 %274
    %276 = vadd.xlane.f32.xlu0 %v256
    %v277 = vpop.xlane.xlu0 %276
    %278 = vadd.xlane.f32.xlu0 %v257
    %v279 = vpop.xlane.xlu0 %278
    %280 = vadd.xlane.f32.xlu0 %v258
    %v281 = vpop.xlane.xlu0 %280
    %282 = vadd.xlane.f32.xlu0 %v259
    %v283 = vpop.xlane.xlu0 %282
    %284 = vadd.xlane.f32.xlu0 %v260
    %v285 = vpop.xlane.xlu0 %284
    %286 = vadd.xlane.f32.xlu0 %v261
    %v287 = vpop.xlane.xlu0 %286
    %288 = vadd.xlane.f32.xlu0 %v262
    %v289 = vpop.xlane.xlu0 %288
    %290 = vadd.xlane.f32.xlu0 %v263
    %v291 = vpop.xlane.xlu0 %290
    %292 = vadd.xlane.f32.xlu0 %v264
    %v293 = vpop.xlane.xlu0 %292
    %294 = vadd.xlane.f32.xlu0 %v265
    %v295 = vpop.xlane.xlu0 %294
    %296 = vadd.xlane.f32.xlu0 %v266
    %v297 = vpop.xlane.xlu0 %296
    %298 = vadd.xlane.f32.xlu0 %v267
    %v299 = vpop.xlane.xlu0 %298
    %v300 = vrcp.pop 128.0
    %v301 = vmul.f32 %v269, %v300
    %v302 = vmul.f32 %v271, %v300
    %v303 = vmul.f32 %v273, %v300
    %v304 = vmul.f32 %v275, %v300
    %v305 = vmul.f32 %v277, %v300
    %v306 = vmul.f32 %v279, %v300
    %v307 = vmul.f32 %v281, %v300
    %v308 = vmul.f32 %v283, %v300
    %v309 = vmul.f32 %v285, %v300
    %v310 = vmul.f32 %v287, %v300
    %v311 = vmul.f32 %v289, %v300
    %v312 = vmul.f32 %v291, %v300
    %v313 = vmul.f32 %v293, %v300
    %v314 = vmul.f32 %v295, %v300
    %v315 = vmul.f32 %v297, %v300
    %v316 = vmul.f32 %v299, %v300
    %v317 = vsub.f32 %v252, %v301
    %v318 = vsub.f32 %v253, %v302
    %v319 = vsub.f32 %v254, %v303
    %v320 = vsub.f32 %v255, %v304
    %v321 = vsub.f32 %v256, %v305
    %v322 = vsub.f32 %v257, %v306
    %v323 = vsub.f32 %v258, %v307
    %v324 = vsub.f32 %v259, %v308
    %v325 = vsub.f32 %v260, %v309
    %v326 = vsub.f32 %v261, %v310
    %v327 = vsub.f32 %v262, %v311
    %v328 = vsub.f32 %v263, %v312
    %v329 = vsub.f32 %v264, %v313
    %v330 = vsub.f32 %v265, %v314
    %v331 = vsub.f32 %v266, %v315
    %v332 = vsub.f32 %v267, %v316
    %v333 = vmul.f32 %v317, %v317
    %v334 = vmul.f32 %v318, %v318
    %v335 = vmul.f32 %v319, %v319
    %v336 = vmul.f32 %v320, %v320
    %v337 = vmul.f32 %v321, %v321
    %v338 = vmul.f32 %v322, %v322
    %v339 = vmul.f32 %v323, %v323
    %v340 = vmul.f32 %v324, %v324
    %v341 = vmul.f32 %v325, %v325
    %v342 = vmul.f32 %v326, %v326
    %v343 = vmul.f32 %v327, %v327
    %v344 = vmul.f32 %v328, %v328
    %v345 = vmul.f32 %v329, %v329
    %v346 = vmul.f32 %v330, %v330
    %v347 = vmul.f32 %v331, %v331
    %v348 = vmul.f32 %v332, %v332
    %349 = vadd.xlane.f32.xlu0 %v333
    %v350 = vpop.xlane.xlu0 %349
    %351 = vadd.xlane.f32.xlu0 %v334
    %v352 = vpop.xlane.xlu0 %351
    %353 = vadd.xlane.f32.xlu0 %v335
    %v354 = vpop.xlane.xlu0 %353
    %355 = vadd.xlane.f32.xlu0 %v336
    %v356 = vpop.xlane.xlu0 %355
    %357 = vadd.xlane.f32.xlu0 %v337
    %v358 = vpop.xlane.xlu0 %357
    %359 = vadd.xlane.f32.xlu0 %v338
    %v360 = vpop.xlane.xlu0 %359
    %361 = vadd.xlane.f32.xlu0 %v339
    %v362 = vpop.xlane.xlu0 %361
    %363 = vadd.xlane.f32.xlu0 %v340
    %v364 = vpop.xlane.xlu0 %363
    %365 = vadd.xlane.f32.xlu0 %v341
    %v366 = vpop.xlane.xlu0 %365
    %367 = vadd.xlane.f32.xlu0 %v342
    %v368 = vpop.xlane.xlu0 %367
    %369 = vadd.xlane.f32.xlu0 %v343
    %v370 = vpop.xlane.xlu0 %369
    %371 = vadd.xlane.f32.xlu0 %v344
    %v372 = vpop.xlane.xlu0 %371
    %373 = vadd.xlane.f32.xlu0 %v345
    %v374 = vpop.xlane.xlu0 %373
    %375 = vadd.xlane.f32.xlu0 %v346
    %v376 = vpop.xlane.xlu0 %375
    %377 = vadd.xlane.f32.xlu0 %v347
    %v378 = vpop.xlane.xlu0 %377
    %379 = vadd.xlane.f32.xlu0 %v348
    %v380 = vpop.xlane.xlu0 %379
    %v381 = vmul.f32 %v350, %v300
    %v382 = vmul.f32 %v352, %v300
    %v383 = vmul.f32 %v354, %v300
    %v384 = vmul.f32 %v356, %v300
    %v385 = vmul.f32 %v358, %v300
    %v386 = vmul.f32 %v360, %v300
    %v387 = vmul.f32 %v362, %v300
    %v388 = vmul.f32 %v364, %v300
    %v389 = vmul.f32 %v366, %v300
    %v390 = vmul.f32 %v368, %v300
    %v391 = vmul.f32 %v370, %v300
    %v392 = vmul.f32 %v372, %v300
    %v393 = vmul.f32 %v374, %v300
    %v394 = vmul.f32 %v376, %v300
    %v395 = vmul.f32 %v378, %v300
    %v396 = vmul.f32 %v380, %v300
    %v397 = vadd.f32 %v381, 1e-05
    %v398 = vadd.f32 %v382, 1e-05
    %v399 = vadd.f32 %v383, 1e-05
    %v400 = vadd.f32 %v384, 1e-05
    %v401 = vadd.f32 %v385, 1e-05
    %v402 = vadd.f32 %v386, 1e-05
    %v403 = vadd.f32 %v387, 1e-05
    %v404 = vadd.f32 %v388, 1e-05
    %v405 = vadd.f32 %v389, 1e-05
    %v406 = vadd.f32 %v390, 1e-05
    %v407 = vadd.f32 %v391, 1e-05
    %v408 = vadd.f32 %v392, 1e-05
    %v409 = vadd.f32 %v393, 1e-05
    %v410 = vadd.f32 %v394, 1e-05
    %v411 = vadd.f32 %v395, 1e-05
    %v412 = vadd.f32 %v396, 1e-05
    %v413 = vrsqrt.pop %v397
    %v414 = vrsqrt.pop %v398
    %v415 = vrsqrt.pop %v399
    %v416 = vrsqrt.pop %v400
    %v417 = vrsqrt.pop %v401
    %v418 = vrsqrt.pop %v402
    %v419 = vrsqrt.pop %v403
    %v420 = vrsqrt.pop %v404
    %v421 = vrsqrt.pop %v405
    %v422 = vrsqrt.pop %v406
    %v423 = vrsqrt.pop %v407
    %v424 = vrsqrt.pop %v408
    %v425 = vrsqrt.pop %v409
    %v426 = vrsqrt.pop %v410
    %v427 = vrsqrt.pop %v411
    %v428 = vrsqrt.pop %v412
    %v429 = vmul.f32 %v317, %v413
    %v430 = vmul.f32 %v318, %v414
    %v431 = vmul.f32 %v319, %v415
    %v432 = vmul.f32 %v320, %v416
    %v433 = vmul.f32 %v321, %v417
    %v434 = vmul.f32 %v322, %v418
    %v435 = vmul.f32 %v323, %v419
    %v436 = vmul.f32 %v324, %v420
    %v437 = vmul.f32 %v325, %v421
    %v438 = vmul.f32 %v326, %v422
    %v439 = vmul.f32 %v327, %v423
    %v440 = vmul.f32 %v328, %v424
    %v441 = vmul.f32 %v329, %v425
    %v442 = vmul.f32 %v330, %v426
    %v443 = vmul.f32 %v331, %v427
    %v444 = vmul.f32 %v332, %v428
    %v445 = vld [vmem:[%s3] sm:$0xff]
    %v446 = vld [vmem:[%s3 + $0x8] sm:$0xff]
    %v447 = vld [vmem:[%s3 + $0x10] sm:$0xff]
    %v448 = vld [vmem:[%s3 + $0x18] sm:$0xff]
    %v449 = vld [vmem:[%s3 + $0x20] sm:$0xff]
    %v450 = vld [vmem:[%s3 + $0x28] sm:$0xff]
    %v451 = vld [vmem:[%s3 + $0x30] sm:$0xff]
    %v452 = vld [vmem:[%s3 + $0x38] sm:$0xff]
    %v453 = vld [vmem:[%s3 + $0x40] sm:$0xff]
    %v454 = vld [vmem:[%s3 + $0x48] sm:$0xff]
    %v455 = vld [vmem:[%s3 + $0x50] sm:$0xff]
    %v456 = vld [vmem:[%s3 + $0x58] sm:$0xff]
    %v457 = vld [vmem:[%s3 + $0x60] sm:$0xff]
    %v458 = vld [vmem:[%s3 + $0x68] sm:$0xff]
    %v459 = vld [vmem:[%s3 + $0x70] sm:$0xff]
    %v460 = vld [vmem:[%s3 + $0x78] sm:$0xff]
    %v461 = vld [vmem:[%s4] sm:$0x1]
    %v463 = vlaneseq
    %v464 = vshrl.u32 %v463, 7
    %v465 = vsub.s32 0, %v464
    %v466 = vrot.slane %v461, %v465
    %468 = vmatprep.subr.mxu0 0.0
    %469 = vmatpush1.msra.mxu0 %v445
    %470 = vmatprep.subr.mxu0 0.0
    %471 = vmatpush1.msra.mxu0 %v446
    %472 = vmatprep.subr.mxu0 0.0
    %473 = vmatpush1.msra.mxu0 %v447
    %474 = vmatprep.subr.mxu0 0.0
    %475 = vmatpush1.msra.mxu0 %v448
    %476 = vmatprep.subr.mxu0 0.0
    %477 = vmatpush1.msra.mxu0 %v449
    %478 = vmatprep.subr.mxu0 0.0
    %479 = vmatpush1.msra.mxu0 %v450
    %480 = vmatprep.subr.mxu0 0.0
    %481 = vmatpush1.msra.mxu0 %v451
    %482 = vmatprep.subr.mxu0 0.0
    %483 = vmatpush1.msra.mxu0 %v452
    %484 = vmatprep.subr.mxu0 0.0
    %485 = vmatpush1.msra.mxu0 %v453
    %486 = vmatprep.subr.mxu0 0.0
    %487 = vmatpush1.msra.mxu0 %v454
    %488 = vmatprep.subr.mxu0 0.0
    %489 = vmatpush1.msra.mxu0 %v455
    %490 = vmatprep.subr.mxu0 0.0
    %491 = vmatpush1.msra.mxu0 %v456
    %492 = vmatprep.subr.mxu0 0.0
    %493 = vmatpush1.msra.mxu0 %v457
    %494 = vmatprep.subr.mxu0 0.0
    %495 = vmatpush1.msra.mxu0 %v458
    %496 = vmatprep.subr.mxu0 0.0
    %497 = vmatpush1.msra.mxu0 %v459
    %498 = vmatprep.subr.mxu0 0.0
    %499 = vmatpush1.msra.mxu0 %v460
    %500 = vmatprep.subr.mxu0 0.0
    %501 = vmatpush1.msra.mxu0 0.0
    %502 = vmatprep.subr.mxu0 0.0
    %503 = vmatpush1.msra.mxu0 0.0
    %504 = vmatprep.subr.mxu0 0.0
    %505 = vmatpush1.msra.mxu0 0.0
    %506 = vmatprep.subr.mxu0 0.0
    %507 = vmatpush1.msra.mxu0 0.0
    %508 = vmatprep.subr.mxu0 0.0
    %509 = vmatpush1.msra.mxu0 0.0
    %510 = vmatprep.subr.mxu0 0.0
    %511 = vmatpush1.msra.mxu0 0.0
    %512 = vmatprep.subr.mxu0 0.0
    %513 = vmatpush1.msra.mxu0 0.0
    %514 = vmatprep.subr.mxu0 0.0
    %515 = vmatpush1.msra.mxu0 0.0
    %516 = vmatprep.subr.mxu0 0.0
    %517 = vmatpush1.msra.mxu0 0.0
    %518 = vmatprep.subr.mxu0 0.0
    %519 = vmatpush1.msra.mxu0 0.0
    %520 = vmatprep.subr.mxu0 0.0
    %521 = vmatpush1.msra.mxu0 0.0
    %522 = vmatprep.subr.mxu0 0.0
    %523 = vmatpush1.msra.mxu0 0.0
    %524 = vmatprep.subr.mxu0 0.0
    %525 = vmatpush1.msra.mxu0 0.0
    %526 = vmatprep.subr.mxu0 0.0
    %527 = vmatpush1.msra.mxu0 0.0
    %528 = vmatprep.subr.mxu0 0.0
    %529 = vmatpush1.msra.mxu0 0.0
    %530 = vmatprep.subr.mxu0 0.0
    %531 = vmatpush1.msra.mxu0 0.0
    %532 = vmatprep.mubr.f32.mxu0 0.0
    %533 = vmatmul.mubr.f32.gmra.mrb[0].mxu0 %v429
    %v534 = vpop.f32.mrb[0].mxu0
    %v535 = vadd.f32 %v466, %v534
    %v536 = vpop.f32.mrb[0].mxu0
    %537 = vmatprep.mubr.f32.mxu0 0.0
    %538 = vmatmul.mubr.f32.gmra.mrb[0].mxu0 %v430
    %v539 = vpop.f32.mrb[0].mxu0
    %v540 = vadd.f32 %v466, %v539
    %v541 = vpop.f32.mrb[0].mxu0
    %542 = vmatprep.mubr.f32.mxu0 0.0
    %543 = vmatmul.mubr.f32.gmra.mrb[0].mxu0 %v431
    %v544 = vpop.f32.mrb[0].mxu0
    %v545 = vadd.f32 %v466, %v544
    %v546 = vpop.f32.mrb[0].mxu0
    %547 = vmatprep.mubr.f32.mxu0 0.0
    %548 = vmatmul.mubr.f32.gmra.mrb[0].mxu0 %v432
    %v549 = vpop.f32.mrb[0].mxu0
    %v550 = vadd.f32 %v466, %v549
    %v551 = vpop.f32.mrb[0].mxu0
    %552 = vmatprep.mubr.f32.mxu0 0.0
    %553 = vmatmul.mubr.f32.gmra.mrb[0].mxu0 %v433
    %v554 = vpop.f32.mrb[0].mxu0
    %v555 = vadd.f32 %v466, %v554
    %v556 = vpop.f32.mrb[0].mxu0
    %557 = vmatprep.mubr.f32.mxu0 0.0
    %558 = vmatmul.mubr.f32.gmra.mrb[0].mxu0 %v434
    %v559 = vpop.f32.mrb[0].mxu0
    %v560 = vadd.f32 %v466, %v559
    %v561 = vpop.f32.mrb[0].mxu0
    %562 = vmatprep.mubr.f32.mxu0 0.0
    %563 = vmatmul.mubr.f32.gmra.mrb[0].mxu0 %v435
    %v564 = vpop.f32.mrb[0].mxu0
    %v565 = vadd.f32 %v466, %v564
    %v566 = vpop.f32.mrb[0].mxu0
    %567 = vmatprep.mubr.f32.mxu0 0.0
    %568 = vmatmul.mubr.f32.gmra.mrb[0].mxu0 %v436
    %v569 = vpop.f32.mrb[0].mxu0
    %v570 = vadd.f32 %v466, %v569
    %v571 = vpop.f32.mrb[0].mxu0
    %572 = vmatprep.mubr.f32.mxu0 0.0
    %573 = vmatmul.mubr.f32.gmra.mrb[0].mxu0 %v437
    %v574 = vpop.f32.mrb[0].mxu0
    %v575 = vadd.f32 %v466, %v574
    %v576 = vpop.f32.mrb[0].mxu0
    %577 = vmatprep.mubr.f32.mxu0 0.0
    %578 = vmatmul.mubr.f32.gmra.mrb[0].mxu0 %v438
    %v579 = vpop.f32.mrb[0].mxu0
    %v580 = vadd.f32 %v466, %v579
    %v581 = vpop.f32.mrb[0].mxu0
    %582 = vmatprep.mubr.f32.mxu0 0.0
    %583 = vmatmul.mubr.f32.gmra.mrb[0].mxu0 %v439
    %v584 = vpop.f32.mrb[0].mxu0
    %v585 = vadd.f32 %v466, %v584
    %v586 = vpop.f32.mrb[0].mxu0
    %587 = vmatprep.mubr.f32.mxu0 0.0
    %588 = vmatmul.mubr.f32.gmra.mrb[0].mxu0 %v440
    %v589 = vpop.f32.mrb[0].mxu0
    %v590 = vadd.f32 %v466, %v589
    %v591 = vpop.f32.mrb[0].mxu0
    %592 = vmatprep.mubr.f32.mxu0 0.0
    %593 = vmatmul.mubr.f32.gmra.mrb[0].mxu0 %v441
    %v594 = vpop.f32.mrb[0].mxu0
    %v595 = vadd.f32 %v466, %v594
    %v596 = vpop.f32.mrb[0].mxu0
    %597 = vmatprep.mubr.f32.mxu0 0.0
    %598 = vmatmul.mubr.f32.gmra.mrb[0].mxu0 %v442
    %v599 = vpop.f32.mrb[0].mxu0
    %v600 = vadd.f32 %v466, %v599
    %v601 = vpop.f32.mrb[0].mxu0
    %602 = vmatprep.mubr.f32.mxu0 0.0
    %603 = vmatmul.mubr.f32.gmra.mrb[0].mxu0 %v443
    %v604 = vpop.f32.mrb[0].mxu0
    %v605 = vadd.f32 %v466, %v604
    %v606 = vpop.f32.mrb[0].mxu0
    %607 = vmatprep.mubr.f32.mxu0 0.0
    %608 = vmatmul.mubr.f32.gmra.mrb[0].mxu0 %v444
    %v609 = vpop.f32.mrb[0].mxu0
    %v610 = vadd.f32 %v466, %v609
    %v611 = vpop.f32.mrb[0].mxu0
    %612 = vdwg.mxu0
    %v613 = vmax.f32 %v535, 0.0
    %v614 = vmax.f32 %v540, 0.0
    %v615 = vmax.f32 %v545, 0.0
    %v616 = vmax.f32 %v550, 0.0
    %v617 = vmax.f32 %v555, 0.0
    %v618 = vmax.f32 %v560, 0.0
    %v619 = vmax.f32 %v565, 0.0
    %v620 = vmax.f32 %v570, 0.0
    %v621 = vmax.f32 %v575, 0.0
    %v622 = vmax.f32 %v580, 0.0
    %v623 = vmax.f32 %v585, 0.0
    %v624 = vmax.f32 %v590, 0.0
    %v625 = vmax.f32 %v595, 0.0
    %v626 = vmax.f32 %v600, 0.0
    %v627 = vmax.f32 %v605, 0.0
    %v628 = vmax.f32 %v610, 0.0
    %v629 = vsel %vm58, %v613, 0.0
    %630 = vadd.xlane.f32.xlu0 %v629
    %v631 = vpop.xlane.xlu0 %630
    %v632 = vsel %vm58, %v614, 0.0
    %633 = vadd.xlane.f32.xlu0 %v632
    %v634 = vpop.xlane.xlu0 %633
    %v635 = vsel %vm58, %v615, 0.0
    %636 = vadd.xlane.f32.xlu0 %v635
    %v637 = vpop.xlane.xlu0 %636
    %v638 = vsel %vm58, %v616, 0.0
    %639 = vadd.xlane.f32.xlu0 %v638
    %v640 = vpop.xlane.xlu0 %639
    %v641 = vsel %vm58, %v617, 0.0
    %642 = vadd.xlane.f32.xlu0 %v641
    %v643 = vpop.xlane.xlu0 %642
    %v644 = vsel %vm58, %v618, 0.0
    %645 = vadd.xlane.f32.xlu0 %v644
    %v646 = vpop.xlane.xlu0 %645
    %v647 = vsel %vm58, %v619, 0.0
    %648 = vadd.xlane.f32.xlu0 %v647
    %v649 = vpop.xlane.xlu0 %648
    %v650 = vsel %vm58, %v620, 0.0
    %651 = vadd.xlane.f32.xlu0 %v650
    %v652 = vpop.xlane.xlu0 %651
    %v653 = vsel %vm58, %v621, 0.0
    %654 = vadd.xlane.f32.xlu0 %v653
    %v655 = vpop.xlane.xlu0 %654
    %v656 = vsel %vm58, %v622, 0.0
    %657 = vadd.xlane.f32.xlu0 %v656
    %v658 = vpop.xlane.xlu0 %657
    %v659 = vsel %vm58, %v623, 0.0
    %660 = vadd.xlane.f32.xlu0 %v659
    %v661 = vpop.xlane.xlu0 %660
    %v662 = vsel %vm58, %v624, 0.0
    %663 = vadd.xlane.f32.xlu0 %v662
    %v664 = vpop.xlane.xlu0 %663
    %v665 = vsel %vm58, %v625, 0.0
    %666 = vadd.xlane.f32.xlu0 %v665
    %v667 = vpop.xlane.xlu0 %666
    %v668 = vsel %vm58, %v626, 0.0
    %669 = vadd.xlane.f32.xlu0 %v668
    %v670 = vpop.xlane.xlu0 %669
    %v671 = vsel %vm58, %v627, 0.0
    %672 = vadd.xlane.f32.xlu0 %v671
    %v673 = vpop.xlane.xlu0 %672
    %v674 = vsel %vm58, %v628, 0.0
    %675 = vadd.xlane.f32.xlu0 %v674
    %v676 = vpop.xlane.xlu0 %675
    %v677 = vrcp.pop 64.0
    %v678 = vmul.f32 %v631, %v677
    %v679 = vmul.f32 %v634, %v677
    %v680 = vmul.f32 %v637, %v677
    %v681 = vmul.f32 %v640, %v677
    %v682 = vmul.f32 %v643, %v677
    %v683 = vmul.f32 %v646, %v677
    %v684 = vmul.f32 %v649, %v677
    %v685 = vmul.f32 %v652, %v677
    %v686 = vmul.f32 %v655, %v677
    %v687 = vmul.f32 %v658, %v677
    %v688 = vmul.f32 %v661, %v677
    %v689 = vmul.f32 %v664, %v677
    %v690 = vmul.f32 %v667, %v677
    %v691 = vmul.f32 %v670, %v677
    %v692 = vmul.f32 %v673, %v677
    %v693 = vmul.f32 %v676, %v677
    %v694 = vsub.f32 %v613, %v678
    %v695 = vsub.f32 %v614, %v679
    %v696 = vsub.f32 %v615, %v680
    %v697 = vsub.f32 %v616, %v681
    %v698 = vsub.f32 %v617, %v682
    %v699 = vsub.f32 %v618, %v683
    %v700 = vsub.f32 %v619, %v684
    %v701 = vsub.f32 %v620, %v685
    %v702 = vsub.f32 %v621, %v686
    %v703 = vsub.f32 %v622, %v687
    %v704 = vsub.f32 %v623, %v688
    %v705 = vsub.f32 %v624, %v689
    %v706 = vsub.f32 %v625, %v690
    %v707 = vsub.f32 %v626, %v691
    %v708 = vsub.f32 %v627, %v692
    %v709 = vsub.f32 %v628, %v693
    %v710 = vmul.f32 %v694, %v694
    %v711 = vmul.f32 %v695, %v695
    %v712 = vmul.f32 %v696, %v696
    %v713 = vmul.f32 %v697, %v697
    %v714 = vmul.f32 %v698, %v698
    %v715 = vmul.f32 %v699, %v699
    %v716 = vmul.f32 %v700, %v700
    %v717 = vmul.f32 %v701, %v701
    %v718 = vmul.f32 %v702, %v702
    %v719 = vmul.f32 %v703, %v703
    %v720 = vmul.f32 %v704, %v704
    %v721 = vmul.f32 %v705, %v705
    %v722 = vmul.f32 %v706, %v706
    %v723 = vmul.f32 %v707, %v707
    %v724 = vmul.f32 %v708, %v708
    %v725 = vmul.f32 %v709, %v709
    %v726 = vsel %vm58, %v710, 0.0
    %727 = vadd.xlane.f32.xlu0 %v726
    %v728 = vpop.xlane.xlu0 %727
    %v729 = vsel %vm58, %v711, 0.0
    %730 = vadd.xlane.f32.xlu0 %v729
    %v731 = vpop.xlane.xlu0 %730
    %v732 = vsel %vm58, %v712, 0.0
    %733 = vadd.xlane.f32.xlu0 %v732
    %v734 = vpop.xlane.xlu0 %733
    %v735 = vsel %vm58, %v713, 0.0
    %736 = vadd.xlane.f32.xlu0 %v735
    %v737 = vpop.xlane.xlu0 %736
    %v738 = vsel %vm58, %v714, 0.0
    %739 = vadd.xlane.f32.xlu0 %v738
    %v740 = vpop.xlane.xlu0 %739
    %v741 = vsel %vm58, %v715, 0.0
    %742 = vadd.xlane.f32.xlu0 %v741
    %v743 = vpop.xlane.xlu0 %742
    %v744 = vsel %vm58, %v716, 0.0
    %745 = vadd.xlane.f32.xlu0 %v744
    %v746 = vpop.xlane.xlu0 %745
    %v747 = vsel %vm58, %v717, 0.0
    %748 = vadd.xlane.f32.xlu0 %v747
    %v749 = vpop.xlane.xlu0 %748
    %v750 = vsel %vm58, %v718, 0.0
    %751 = vadd.xlane.f32.xlu0 %v750
    %v752 = vpop.xlane.xlu0 %751
    %v753 = vsel %vm58, %v719, 0.0
    %754 = vadd.xlane.f32.xlu0 %v753
    %v755 = vpop.xlane.xlu0 %754
    %v756 = vsel %vm58, %v720, 0.0
    %757 = vadd.xlane.f32.xlu0 %v756
    %v758 = vpop.xlane.xlu0 %757
    %v759 = vsel %vm58, %v721, 0.0
    %760 = vadd.xlane.f32.xlu0 %v759
    %v761 = vpop.xlane.xlu0 %760
    %v762 = vsel %vm58, %v722, 0.0
    %763 = vadd.xlane.f32.xlu0 %v762
    %v764 = vpop.xlane.xlu0 %763
    %v765 = vsel %vm58, %v723, 0.0
    %766 = vadd.xlane.f32.xlu0 %v765
    %v767 = vpop.xlane.xlu0 %766
    %v768 = vsel %vm58, %v724, 0.0
    %769 = vadd.xlane.f32.xlu0 %v768
    %v770 = vpop.xlane.xlu0 %769
    %v771 = vsel %vm58, %v725, 0.0
    %772 = vadd.xlane.f32.xlu0 %v771
    %v773 = vpop.xlane.xlu0 %772
    %v774 = vmul.f32 %v728, %v677
    %v775 = vmul.f32 %v731, %v677
    %v776 = vmul.f32 %v734, %v677
    %v777 = vmul.f32 %v737, %v677
    %v778 = vmul.f32 %v740, %v677
    %v779 = vmul.f32 %v743, %v677
    %v780 = vmul.f32 %v746, %v677
    %v781 = vmul.f32 %v749, %v677
    %v782 = vmul.f32 %v752, %v677
    %v783 = vmul.f32 %v755, %v677
    %v784 = vmul.f32 %v758, %v677
    %v785 = vmul.f32 %v761, %v677
    %v786 = vmul.f32 %v764, %v677
    %v787 = vmul.f32 %v767, %v677
    %v788 = vmul.f32 %v770, %v677
    %v789 = vmul.f32 %v773, %v677
    %v790 = vadd.f32 %v774, 1e-05
    %v791 = vadd.f32 %v775, 1e-05
    %v792 = vadd.f32 %v776, 1e-05
    %v793 = vadd.f32 %v777, 1e-05
    %v794 = vadd.f32 %v778, 1e-05
    %v795 = vadd.f32 %v779, 1e-05
    %v796 = vadd.f32 %v780, 1e-05
    %v797 = vadd.f32 %v781, 1e-05
    %v798 = vadd.f32 %v782, 1e-05
    %v799 = vadd.f32 %v783, 1e-05
    %v800 = vadd.f32 %v784, 1e-05
    %v801 = vadd.f32 %v785, 1e-05
    %v802 = vadd.f32 %v786, 1e-05
    %v803 = vadd.f32 %v787, 1e-05
    %v804 = vadd.f32 %v788, 1e-05
    %v805 = vadd.f32 %v789, 1e-05
    %v806 = vrsqrt.pop %v790
    %v807 = vrsqrt.pop %v791
    %v808 = vrsqrt.pop %v792
    %v809 = vrsqrt.pop %v793
    %v810 = vrsqrt.pop %v794
    %v811 = vrsqrt.pop %v795
    %v812 = vrsqrt.pop %v796
    %v813 = vrsqrt.pop %v797
    %v814 = vrsqrt.pop %v798
    %v815 = vrsqrt.pop %v799
    %v816 = vrsqrt.pop %v800
    %v817 = vrsqrt.pop %v801
    %v818 = vrsqrt.pop %v802
    %v819 = vrsqrt.pop %v803
    %v820 = vrsqrt.pop %v804
    %v821 = vrsqrt.pop %v805
    %v822 = vmul.f32 %v694, %v806
    %v823 = vmul.f32 %v695, %v807
    %v824 = vmul.f32 %v696, %v808
    %v825 = vmul.f32 %v697, %v809
    %v826 = vmul.f32 %v698, %v810
    %v827 = vmul.f32 %v699, %v811
    %v828 = vmul.f32 %v700, %v812
    %v829 = vmul.f32 %v701, %v813
    %v830 = vmul.f32 %v702, %v814
    %v831 = vmul.f32 %v703, %v815
    %v832 = vmul.f32 %v704, %v816
    %v833 = vmul.f32 %v705, %v817
    %v834 = vmul.f32 %v706, %v818
    %v835 = vmul.f32 %v707, %v819
    %v836 = vmul.f32 %v708, %v820
    %v837 = vmul.f32 %v709, %v821
    %v838 = vld [vmem:[%s5] sm:$0xff]
    %v839 = vld [vmem:[%s5 + $0x8] sm:$0xff]
    %v840 = vld [vmem:[%s5 + $0x10] sm:$0xff]
    %v841 = vld [vmem:[%s5 + $0x18] sm:$0xff]
    %v842 = vld [vmem:[%s5 + $0x20] sm:$0xff]
    %v843 = vld [vmem:[%s5 + $0x28] sm:$0xff]
    %v844 = vld [vmem:[%s5 + $0x30] sm:$0xff]
    %v845 = vld [vmem:[%s5 + $0x38] sm:$0xff]
    %v846 = vld [vmem:[%s6] sm:$0xff]
    %848 = vset.pattern.permute.xlu0 0
    %849 = vperm.xlu0 %848, %v846
    %v850 = vpop.permute.xlu0 %849
    %852 = vxpose.xlu0.b32.start [1/16] %v838, 128
    %853 = vxpose.xlu0.b32.cont [2/16] %v839, 128
    %854 = vxpose.xlu0.b32.cont [3/16] %v840, 128
    %855 = vxpose.xlu0.b32.cont [4/16] %v841, 128
    %856 = vxpose.xlu0.b32.cont [5/16] %v842, 128
    %857 = vxpose.xlu0.b32.cont [6/16] %v843, 128
    %858 = vxpose.xlu0.b32.cont [7/16] %v844, 128
    %859 = vxpose.xlu0.b32.cont [8/16] %v845, 128
    %860 = vxpose.xlu0.b32.cont [9/16] 0.0, 128
    %861 = vxpose.xlu0.b32.cont [10/16] 0.0, 128
    %862 = vxpose.xlu0.b32.cont [11/16] 0.0, 128
    %863 = vxpose.xlu0.b32.cont [12/16] 0.0, 128
    %864 = vxpose.xlu0.b32.cont [13/16] 0.0, 128
    %865 = vxpose.xlu0.b32.cont [14/16] 0.0, 128
    %866 = vxpose.xlu0.b32.cont [15/16] 0.0, 128
    %867 = vxpose.xlu0.b32.end [16/16] 0.0, 128
    %v868 = vpop.trf.xlu0
    %v869 = vpop.trf.xlu0
    %v870 = vpop.trf.xlu0
    %v871 = vpop.trf.xlu0
    %v872 = vpop.trf.xlu0
    %v873 = vpop.trf.xlu0
    %v874 = vpop.trf.xlu0
    %v875 = vpop.trf.xlu0
    %v876 = vpop.trf.xlu0
    %v877 = vpop.trf.xlu0
    %v878 = vpop.trf.xlu0
    %v879 = vpop.trf.xlu0
    %v880 = vpop.trf.xlu0
    %v881 = vpop.trf.xlu0
    %v882 = vpop.trf.xlu0
    %v883 = vpop.trf.xlu0
    %v885 = vsel %vm58, %v868, 0
    %v888 = vsel %vm58, %v822, 0
    %v891 = vsel %vm58, %v823, 0
    %v894 = vsel %vm58, %v824, 0
    %v897 = vsel %vm58, %v825, 0
    %v900 = vsel %vm58, %v826, 0
    %v903 = vsel %vm58, %v827, 0
    %v906 = vsel %vm58, %v828, 0
    %v909 = vsel %vm58, %v829, 0
    %v912 = vsel %vm58, %v830, 0
    %v915 = vsel %vm58, %v831, 0
    %v918 = vsel %vm58, %v832, 0
    %v921 = vsel %vm58, %v833, 0
    %v924 = vsel %vm58, %v834, 0
    %v927 = vsel %vm58, %v835, 0
    %v930 = vsel %vm58, %v836, 0
    %v933 = vsel %vm58, %v837, 0
    %935 = vmatprep.subr.mxu0 0.0
    %936 = vmatpush1.xpose.msra.mxu0 %v888
    %937 = vmatprep.subr.mxu0 0.0
    %938 = vmatpush1.xpose.msra.mxu0 %v891
    %939 = vmatprep.subr.mxu0 0.0
    %940 = vmatpush1.xpose.msra.mxu0 %v894
    %941 = vmatprep.subr.mxu0 0.0
    %942 = vmatpush1.xpose.msra.mxu0 %v897
    %943 = vmatprep.subr.mxu0 0.0
    %944 = vmatpush1.xpose.msra.mxu0 %v900
    %945 = vmatprep.subr.mxu0 0.0
    %946 = vmatpush1.xpose.msra.mxu0 %v903
    %947 = vmatprep.subr.mxu0 0.0
    %948 = vmatpush1.xpose.msra.mxu0 %v906
    %949 = vmatprep.subr.mxu0 0.0
    %950 = vmatpush1.xpose.msra.mxu0 %v909
    %951 = vmatprep.subr.mxu0 0.0
    %952 = vmatpush1.xpose.msra.mxu0 %v912
    %953 = vmatprep.subr.mxu0 0.0
    %954 = vmatpush1.xpose.msra.mxu0 %v915
    %955 = vmatprep.subr.mxu0 0.0
    %956 = vmatpush1.xpose.msra.mxu0 %v918
    %957 = vmatprep.subr.mxu0 0.0
    %958 = vmatpush1.xpose.msra.mxu0 %v921
    %959 = vmatprep.subr.mxu0 0.0
    %960 = vmatpush1.xpose.msra.mxu0 %v924
    %961 = vmatprep.subr.mxu0 0.0
    %962 = vmatpush1.xpose.msra.mxu0 %v927
    %963 = vmatprep.subr.mxu0 0.0
    %964 = vmatpush1.xpose.msra.mxu0 %v930
    %965 = vmatprep.subr.mxu0 0.0
    %966 = vmatpush1.xpose.msra.mxu0 %v933
    %967 = vmatprep.subr.mxu0 0.0
    %968 = vmatpush1.xpose.msra.mxu0 0.0
    %969 = vmatprep.subr.mxu0 0.0
    %970 = vmatpush1.xpose.msra.mxu0 0.0
    %971 = vmatprep.subr.mxu0 0.0
    %972 = vmatpush1.xpose.msra.mxu0 0.0
    %973 = vmatprep.subr.mxu0 0.0
    %974 = vmatpush1.xpose.msra.mxu0 0.0
    %975 = vmatprep.subr.mxu0 0.0
    %976 = vmatpush1.xpose.msra.mxu0 0.0
    %977 = vmatprep.subr.mxu0 0.0
    %978 = vmatpush1.xpose.msra.mxu0 0.0
    %979 = vmatprep.subr.mxu0 0.0
    %980 = vmatpush1.xpose.msra.mxu0 0.0
    %981 = vmatprep.subr.mxu0 0.0
    %982 = vmatpush1.xpose.msra.mxu0 0.0
    %983 = vmatprep.subr.mxu0 0.0
    %984 = vmatpush1.xpose.msra.mxu0 0.0
    %985 = vmatprep.subr.mxu0 0.0
    %986 = vmatpush1.xpose.msra.mxu0 0.0
    %987 = vmatprep.subr.mxu0 0.0
    %988 = vmatpush1.xpose.msra.mxu0 0.0
    %989 = vmatprep.subr.mxu0 0.0
    %990 = vmatpush1.xpose.msra.mxu0 0.0
    %991 = vmatprep.subr.mxu0 0.0
    %992 = vmatpush1.xpose.msra.mxu0 0.0
    %993 = vmatprep.subr.mxu0 0.0
    %994 = vmatpush1.xpose.msra.mxu0 0.0
    %995 = vmatprep.subr.mxu0 0.0
    %996 = vmatpush1.xpose.msra.mxu0 0.0
    %997 = vmatprep.subr.mxu0 0.0
    %998 = vmatpush1.xpose.msra.mxu0 0.0
    %999 = vmatprep.mubr.f32.mxu0 0.0
    %1000 = vmatmul.mubr.f32.gmra.mrb[0].mxu0 %v885
    %v1001 = vpop.f32.mrb[0].mxu0
    %v1002 = vadd.f32 %v850, %v1001
    %v1003 = vpop.f32.mrb[0].mxu0
    %1004 = vdwg.mxu0
    %v1005 = vtanh.pop %v1002
    %1006 = vst [vmem:[#allocation2] sm:$0xff] %v1005
    // Predicated region
    $region30: #{tpu_custom_call.1} parent=1 // pred_check
      _
    $region31: #{tpu_custom_call.1} parent=1 // pred_check_branch
      %1008 = sbr.rel (0) target = $region33
    $region32: #{tpu_custom_call.1} parent=1 // pred_region
      %s1010 = ssub.s32 128, 128
      %1011 = vsyncadd [#allocation3], %s1010
      %s1013 = sshll.u32 [#allocation2], 4
      %s1014 = int_to_ptr.vmem [resolvable:$true] %s1013
      %1016 = dma.vmem_to_hbm [thread:$0]  %s1014, 128, %s7, [#allocation3]
    $region33: #{tpu_custom_call.1} parent=1 // pred_fallthru
      _
    // Predicated region
    $region34: #{tpu_custom_call.1} parent=1 // pred_check
      _
    $region35: #{tpu_custom_call.1} parent=1 // pred_check_branch
      %1018 = sbr.rel (0) target = $region37
    $region36: #{tpu_custom_call.1} parent=1 // pred_region
      %1019 = dma.done [#allocation3], 128
    $region37: #{tpu_custom_call.1} parent=1 // pred_fallthru
      _
    %1020 = vsyncpa [#allocation3], 1

</llo_original>
